<compile_context>
chip_gen: v6e
topology: v6e:2x2x1
jax: 0.10.0
libtpu: 0.0.40
codegen_flags: <defaults>
</compile_context>

<pallas_src>
import math

import jax
import jax.numpy as jnp
from jax.experimental import pallas as pl
from jax.experimental.pallas import tpu as pltpu

HIDDEN = 64        # logical hidden width of the PyTorch module
HIDDEN_PAD = 128   # padded to a full vreg / MXU lane width


def _round_up(x, m):
    return (x + m - 1) // m * m


def _pick_batch_tile(B, block_rows):
    """Batch tile: a multiple of 128 when possible (bf16 (16,128) sublane pack,
    full MXU LHS row groups), else 16 for tiny batches.  For batches large
    enough to amortize per-grid-step overhead, the tile is capped so the grid
    has >= 2 steps, which lets dimension_semantics=("parallel",) shard the
    batch axis across both v7x TensorCores (no-op on v5e/v6e)."""
    g = 128 if B >= 128 else 16
    tb = _round_up(min(max(block_rows, g), B), g)
    if B >= 256:
        two_step = max(128, (_round_up(B, g) // 2) // g * g)
        tb = min(tb, two_step)
    return tb, _round_up(B, tb)


def _mlp_kernel(x_ref, w1_ref, b1_ref, w2_ref, b2_ref, w3_ref, b3_ref, o_ref):
    # linear1 + ReLU  (BN1 is folded into w2/b2; dropout = identity in eval)
    h = jnp.dot(x_ref[...], w1_ref[...], preferred_element_type=jnp.float32)
    h = jnp.maximum(h + b1_ref[...], 0.0)

    # linear2 (with folded BN1) + ReLU  (BN2 folded into w3/b3; dropout = id)
    h = jnp.dot(h.astype(jnp.bfloat16), w2_ref[...],
                preferred_element_type=jnp.float32)
    h = jnp.maximum(h + b2_ref[...], 0.0)

    # linear3 (with folded BN2): N=1, so keep it off the MXU -- VPU multiply
    # against the resident (1, HP) f32 weight row + cross-lane (XLU) reduce.
    y = jnp.sum(h * w3_ref[...], axis=-1, keepdims=True) + b3_ref[0, 0]

    # sigmoid: EUP exp + approx EUP reciprocal (both in otherwise-idle slots)
    o_ref[...] = pl.reciprocal(1.0 + jnp.exp(-y), approx=True)


def binary_classification_forward(x, folded_params, *, block_rows=1024):
    """x: (B, F) float. Returns (B, 1) float32 sigmoid probabilities."""
    w1, b1, w2, b2, w3_row, b3 = folded_params
    B, F = x.shape
    HP = w1.shape[1]

    TB, Bp = _pick_batch_tile(B, block_rows)

    xb = x.astype(jnp.bfloat16)
    if Bp != B:
        xb = jnp.pad(xb, ((0, Bp - B), (0, 0)))

    resident = lambda i: (0, 0)  # same block every step -> DMA'd once, stays in VMEM

    out = pl.pallas_call(
        _mlp_kernel,
        out_shape=jax.ShapeDtypeStruct((Bp, 1), jnp.float32),
        grid=(Bp // TB,),
        in_specs=[
            pl.BlockSpec((TB, F), lambda i: (i, 0)),   # x: batch-tiled, pipelined
            pl.BlockSpec((F, HP), resident),           # w1 (bf16)
            pl.BlockSpec((1, HP), resident),           # b1 (f32)
            pl.BlockSpec((HP, HP), resident),          # w2 with BN1 folded (bf16)
            pl.BlockSpec((1, HP), resident),           # b2 with BN1 folded (f32)
            pl.BlockSpec((1, HP), resident),           # w3 row, BN2 folded (f32, VPU path)
            pl.BlockSpec(memory_space=pltpu.MemorySpace.SMEM),  # b3 scalar (1,1)
        ],
        out_specs=pl.BlockSpec((TB, 1), lambda i: (i, 0)),
        compiler_params=pltpu.CompilerParams(
            dimension_semantics=("parallel",),
            vmem_limit_bytes=32 * 1024 * 1024,
        ),
    )(xb, w1, b1, w2, b2, w3_row, b3)

    # NOTE: padded rows [B:Bp] hold sigmoid(b3)-like values; always slice here.
    return out[:B]


# -------------------- parameter construction / preparation --------------------

def make_module_params(key, input_features, hidden=HIDDEN):
    """Raw parameters with PyTorch-module semantics (Linear stored as (in, out))."""
    def linear_init(k, fan_in, fan_out):
        kw, kb = jax.random.split(k)
        bound = 1.0 / math.sqrt(fan_in)
        w = jax.random.uniform(kw, (fan_in, fan_out), jnp.float32, -bound, bound)
        b = jax.random.uniform(kb, (1, fan_out), jnp.float32, -bound, bound)
        return w, b

    k1, k2, k3, k4, k5, k6, k7, k8 = jax.random.split(key, 8)
    w1, b1 = linear_init(k1, input_features, hidden)
    w2, b2 = linear_init(k2, hidden, hidden)
    w3, b3 = linear_init(k3, hidden, 1)

    eps = 1e-5
    # Non-trivial BatchNorm parameters / running stats so the folding is exercised.
    g1 = jax.random.uniform(k4, (hidden,), jnp.float32, 0.5, 1.5)
    be1 = 0.1 * jax.random.normal(k5, (hidden,), jnp.float32)
    m1 = 0.5 * jax.random.normal(k6, (hidden,), jnp.float32)
    v1 = jax.random.uniform(k7, (hidden,), jnp.float32, 0.5, 2.0)
    g2 = jnp.ones((hidden,), jnp.float32)
    be2 = jnp.zeros((hidden,), jnp.float32)
    m2 = 0.25 * jax.random.normal(k8, (hidden,), jnp.float32)
    v2 = jnp.full((hidden,), 1.3, jnp.float32)
    return (w1, b1, g1, be1, m1, v1, w2, b2, g2, be2, m2, v2, w3, b3, eps)


def fold_and_pad_params(raw, hidden_pad=HIDDEN_PAD):
    """Fold eval-mode BatchNorm into the following Linear, pad hidden to 128,
    cast MXU weights to bf16 (biases f32), and lay out layer 3 as a (1, HP)
    f32 row for the VPU multiply + lane-reduce path."""
    (w1, b1, g1, be1, m1, v1, w2, b2, g2, be2, m2, v2, w3, b3, eps) = raw
    F, H = w1.shape
    HP = hidden_pad

    s1 = g1 / jnp.sqrt(v1 + eps)
    t1 = be1 - m1 * s1
    s2 = g2 / jnp.sqrt(v2 + eps)
    t2 = be2 - m2 * s2

    w2f = w2 * s1[:, None]                 # BN1 scale into rows of W2
    b2f = b2 + t1[None, :] @ w2            # BN1 shift into b2
    w3f = w3 * s2[:, None]                 # BN2 scale into rows of W3
    b3f = b3 + t2[None, :] @ w3            # BN2 shift into b3

    w1p = jnp.zeros((F, HP), jnp.float32).at[:, :H].set(w1)
    b1p = jnp.zeros((1, HP), jnp.float32).at[:, :H].set(b1)
    w2p = jnp.zeros((HP, HP), jnp.float32).at[:H, :H].set(w2f)
    b2p = jnp.zeros((1, HP), jnp.float32).at[:, :H].set(b2f)
    w3row = jnp.zeros((1, HP), jnp.float32).at[0, :H].set(w3f[:, 0])
    b3p = b3f.reshape(1, 1).astype(jnp.float32)

    return (w1p.astype(jnp.bfloat16), b1p,
            w2p.astype(jnp.bfloat16), b2p,
            w3row, b3p)


# ------------------------------- references ----------------------------------

def _module_reference_f32(x, raw):
    """Exact eval-mode PyTorch-module semantics in f32 (dropout = identity)."""
    (w1, b1, g1, be1, m1, v1, w2, b2, g2, be2, m2, v2, w3, b3, eps) = raw
    h = jnp.maximum(x @ w1 + b1, 0.0)
    h = (h - m1) / jnp.sqrt(v1 + eps) * g1 + be1
    h = jnp.maximum(h @ w2 + b2, 0.0)
    h = (h - m2) / jnp.sqrt(v2 + eps) * g2 + be2
    return jax.nn.sigmoid(h @ w3 + b3)


def _folded_reference(x, fp):
    """Same folded/padded math as the kernel (bf16 MXU layers, f32 layer-3 row
    dot), but with an exact sigmoid."""
    w1, b1, w2, b2, w3_row, b3 = fp
    f32 = jnp.float32
    h = jnp.maximum(jnp.dot(x.astype(jnp.bfloat16), w1,
                            preferred_element_type=f32) + b1, 0.0)
    h = jnp.maximum(jnp.dot(h.astype(jnp.bfloat16), w2,
                            preferred_element_type=f32) + b2, 0.0)
    y = jnp.sum(h * w3_row, axis=-1, keepdims=True) + b3[0, 0]
    return jax.nn.sigmoid(y)


if __name__ == "__main__":
    key = jax.random.PRNGKey(0)
    kx, kp = jax.random.split(key)

    batch = 250            # deliberately not a multiple of the row tile
    input_features = 16

    x = jax.random.normal(kx, (batch, input_features), jnp.float32)
    raw = make_module_params(kp, input_features)
    folded = fold_and_pad_params(raw)

    out = binary_classification_forward(x, folded)
    out = jax.block_until_ready(out)
    assert out.shape == (batch, 1)

    # Tight check against a reference doing the same folded/padded math.
    ref_b = _folded_reference(x, folded)
    assert jnp.allclose(out, ref_b, atol=8e-3, rtol=0.0), \
        float(jnp.max(jnp.abs(out - ref_b)))

    # Loose check against the exact f32 module (eval) semantics (bf16 tolerance).
    ref_f = _module_reference_f32(x, raw)
    assert jnp.allclose(out, ref_f, atol=4e-2, rtol=0.0), \
        float(jnp.max(jnp.abs(out - ref_f)))

    print("KERNEL_OK")
</pallas_src>

<mosaic_0001>
module attributes {stable_mosaic.version = 11 : i64} {
  func.func @_mlp_kernel(%arg0: i32, %arg1: memref<256x16xbf16, #tpu.memory_space<vmem>>, %arg2: memref<16x128xbf16, #tpu.memory_space<vmem>>, %arg3: memref<1x128xf32, #tpu.memory_space<vmem>>, %arg4: memref<128x128xbf16, #tpu.memory_space<vmem>>, %arg5: memref<1x128xf32, #tpu.memory_space<vmem>>, %arg6: memref<1x128xf32, #tpu.memory_space<vmem>>, %arg7: memref<1x1xf32, #tpu.memory_space<smem>>, %arg8: memref<256x1xf32, #tpu.memory_space<vmem>>) attributes {dimension_semantics = [#tpu.dimension_semantics<parallel>], iteration_bounds = array<i64: 1>, scalar_prefetch = 0 : i64, scratch_operands = 0 : i64, tpu.core_type = #tpu.core_type<tc>, window_params = [{transform_indices = @transform_0, window_bounds = array<i64: 256, 16>}, {pipeline_mode = #tpu.pipeline_mode<synchronous>, transform_indices = @transform_1, window_bounds = array<i64: 16, 128>}, {pipeline_mode = #tpu.pipeline_mode<synchronous>, transform_indices = @transform_2, window_bounds = array<i64: 1, 128>}, {pipeline_mode = #tpu.pipeline_mode<synchronous>, transform_indices = @transform_3, window_bounds = array<i64: 128, 128>}, {pipeline_mode = #tpu.pipeline_mode<synchronous>, transform_indices = @transform_4, window_bounds = array<i64: 1, 128>}, {pipeline_mode = #tpu.pipeline_mode<synchronous>, transform_indices = @transform_5, window_bounds = array<i64: 1, 128>}, {transform_indices = @transform_6, window_bounds = array<i64: 1, 1>}, {transform_indices = @transform_7, window_bounds = array<i64: 256, 1>}]} {
    %c0 = arith.constant 0 : index
    %c0_0 = arith.constant 0 : index
    %0 = vector.load %arg1[%c0, %c0_0] : memref<256x16xbf16, #tpu.memory_space<vmem>>, vector<256x16xbf16>
    %c0_1 = arith.constant 0 : index
    %c0_2 = arith.constant 0 : index
    %1 = vector.load %arg2[%c0_1, %c0_2] : memref<16x128xbf16, #tpu.memory_space<vmem>>, vector<16x128xbf16>
    %cst = arith.constant dense<0.000000e+00> : vector<256x128xf32>
    %2 = tpu.matmul %0, %1, %cst {dimension_numbers = #tpu.dot_dimension_numbers<[1], [0], [0], [1], [0, 0, 1, 1], [], []>} : vector<256x16xbf16>, vector<16x128xbf16>, vector<256x128xf32> -> vector<256x128xf32>
    %c0_3 = arith.constant 0 : index
    %c0_4 = arith.constant 0 : index
    %3 = vector.load %arg3[%c0_3, %c0_4] : memref<1x128xf32, #tpu.memory_space<vmem>>, vector<1x128xf32>
    %4 = vector.broadcast %3 : vector<1x128xf32> to vector<256x128xf32>
    %5 = arith.addf %2, %4 : vector<256x128xf32>
    %cst_5 = arith.constant 0.000000e+00 : f32
    %6 = vector.broadcast %cst_5 : f32 to vector<256x128xf32>
    %7 = arith.maximumf %5, %6 : vector<256x128xf32>
    %8 = arith.truncf %7 : vector<256x128xf32> to vector<256x128xbf16>
    %c0_6 = arith.constant 0 : index
    %c0_7 = arith.constant 0 : index
    %9 = vector.load %arg4[%c0_6, %c0_7] : memref<128x128xbf16, #tpu.memory_space<vmem>>, vector<128x128xbf16>
    %cst_8 = arith.constant dense<0.000000e+00> : vector<256x128xf32>
    %10 = tpu.matmul %8, %9, %cst_8 {dimension_numbers = #tpu.dot_dimension_numbers<[1], [0], [0], [1], [0, 0, 1, 1], [], []>} : vector<256x128xbf16>, vector<128x128xbf16>, vector<256x128xf32> -> vector<256x128xf32>
    %c0_9 = arith.constant 0 : index
    %c0_10 = arith.constant 0 : index
    %11 = vector.load %arg5[%c0_9, %c0_10] : memref<1x128xf32, #tpu.memory_space<vmem>>, vector<1x128xf32>
    %12 = vector.broadcast %11 : vector<1x128xf32> to vector<256x128xf32>
    %13 = arith.addf %10, %12 : vector<256x128xf32>
    %cst_11 = arith.constant 0.000000e+00 : f32
    %14 = vector.broadcast %cst_11 : f32 to vector<256x128xf32>
    %15 = arith.maximumf %13, %14 : vector<256x128xf32>
    %c0_12 = arith.constant 0 : index
    %c0_13 = arith.constant 0 : index
    %16 = vector.load %arg6[%c0_12, %c0_13] : memref<1x128xf32, #tpu.memory_space<vmem>>, vector<1x128xf32>
    %17 = vector.broadcast %16 : vector<1x128xf32> to vector<256x128xf32>
    %18 = arith.mulf %15, %17 : vector<256x128xf32>
    %cst_14 = arith.constant dense<0.000000e+00> : vector<256xf32>
    %19 = vector.multi_reduction <add>, %18, %cst_14 [1] : vector<256x128xf32> to vector<256xf32>
    %20 = vector.shape_cast %19 : vector<256xf32> to vector<256x1xf32>
    %c0_15 = arith.constant 0 : index
    %c0_16 = arith.constant 0 : index
    %21 = memref.load %arg7[%c0_15, %c0_16] : memref<1x1xf32, #tpu.memory_space<smem>>
    %22 = vector.broadcast %21 : f32 to vector<256x1xf32>
    %23 = arith.addf %20, %22 : vector<256x1xf32>
    %cst_17 = arith.constant 0.000000e+00 : f32
    %24 = vector.broadcast %cst_17 : f32 to vector<256x1xf32>
    %25 = arith.subf %24, %23 : vector<256x1xf32>
    %26 = math.exp %25 : vector<256x1xf32>
    %cst_18 = arith.constant 1.000000e+00 : f32
    %27 = vector.broadcast %cst_18 : f32 to vector<256x1xf32>
    %28 = arith.addf %27, %26 : vector<256x1xf32>
    %29 = tpu.reciprocal %28 {approx = true} : vector<256x1xf32> -> vector<256x1xf32>
    %c0_19 = arith.constant 0 : index
    %c0_20 = arith.constant 0 : index
    %30 = vector.load %arg8[%c0_19, %c0_20] : memref<256x1xf32, #tpu.memory_space<vmem>>, vector<256x1xf32>
    tpu.vector_store %arg8[%c0_19, %c0_20], %29 {strides = array<i32>} : memref<256x1xf32, #tpu.memory_space<vmem>>, vector<256x1xf32>,
    return
  }
  func.func @transform_0(%arg0: i32) -> (i32, i32) {
    %c0_i32 = arith.constant 0 : i32
    %c0_i32_0 = arith.constant 0 : i32
    return %arg0, %c0_i32 : i32, i32
  }
  func.func @transform_1(%arg0: i32) -> (i32, i32) {
    %c0_i32 = arith.constant 0 : i32
    %c0_i32_0 = arith.constant 0 : i32
    %c0_i32_1 = arith.constant 0 : i32
    return %c0_i32, %c0_i32_0 : i32, i32
  }
  func.func @transform_2(%arg0: i32) -> (i32, i32) {
    %c0_i32 = arith.constant 0 : i32
    %c0_i32_0 = arith.constant 0 : i32
    %c0_i32_1 = arith.constant 0 : i32
    return %c0_i32, %c0_i32_0 : i32, i32
  }
  func.func @transform_3(%arg0: i32) -> (i32, i32) {
    %c0_i32 = arith.constant 0 : i32
    %c0_i32_0 = arith.constant 0 : i32
    %c0_i32_1 = arith.constant 0 : i32
    return %c0_i32, %c0_i32_0 : i32, i32
  }
  func.func @transform_4(%arg0: i32) -> (i32, i32) {
    %c0_i32 = arith.constant 0 : i32
    %c0_i32_0 = arith.constant 0 : i32
    %c0_i32_1 = arith.constant 0 : i32
    return %c0_i32, %c0_i32_0 : i32, i32
  }
  func.func @transform_5(%arg0: i32) -> (i32, i32) {
    %c0_i32 = arith.constant 0 : i32
    %c0_i32_0 = arith.constant 0 : i32
    %c0_i32_1 = arith.constant 0 : i32
    return %c0_i32, %c0_i32_0 : i32, i32
  }
  func.func @transform_6(%arg0: i32) -> (i32, i32) {
    %c0_i32 = arith.constant 0 : i32
    %c0_i32_0 = arith.constant 0 : i32
    %c0_i32_1 = arith.constant 0 : i32
    return %c0_i32, %c0_i32_0 : i32, i32
  }
  func.func @transform_7(%arg0: i32) -> (i32, i32) {
    %c0_i32 = arith.constant 0 : i32
    %c0_i32_0 = arith.constant 0 : i32
    return %arg0, %c0_i32 : i32, i32
  }
}

</mosaic_0001>

<llo_original>
// kernel: tpu_custom_call.1
$region0: #{tpu_custom_call.1}
  #allocation0 [shape = 'u32[]', space=smem, size = 0x4, offset = 0x4, fixed_abs, tag = 'smem constant byte address 0x4 - core index']
  #allocation1 [shape = 'u32[144,128]{1,0:T(1,128)}', space=vmem, size = 0x12000, scoped, tag = 'internal scratch']
  #allocation2 [shape = 'f32[1,1]{1,0:T(1,128)S(6)}', space=smem, size = 0x200, scoped, tag = 'scoped memory for tpu_custom_call.1']
  %s0 = inlined_call_operand.vmem [shape: bf16[256,16], index: 0, kind: input, shape index: {}]
  %s1 = inlined_call_operand.vmem [shape: bf16[16,128], index: 1, kind: input, shape index: {}]
  %s2 = inlined_call_operand.vmem [shape: f32[1,128], index: 2, kind: input, shape index: {}]
  %s3 = inlined_call_operand.vmem [shape: bf16[128,128], index: 3, kind: input, shape index: {}]
  %s4 = inlined_call_operand.vmem [shape: f32[1,128], index: 4, kind: input, shape index: {}]
  %s5 = inlined_call_operand.vmem [shape: f32[1,128], index: 5, kind: input, shape index: {}]
  %s6 = inlined_call_operand.<no memory space> [shape: f32[1,1], index: 6, kind: input, shape index: {}]
  %s7 = inlined_call_operand.vmem [shape: f32[256,1], index: 7, kind: output, shape index: {}]
  %s8 = sld [smem:[#allocation0]]
  $region38: #{tpu_custom_call.1} parent=0
    _
  %s10 = ssub.s32 1, %s8
  %s11 = scalar_select 0, %s10, %s8
  %12 = sst [smem:[#allocation2]] %s6
  // Predicated region
  $region2: #{tpu_custom_call.1} parent=0 // pred_check
    _
  $region3: #{tpu_custom_call.1} parent=0 // pred_check_branch
    %14 = sbr.rel (0) target = $region5
  $region4: #{tpu_custom_call.1} parent=0 // pred_region
    _
  $region5: #{tpu_custom_call.1} parent=0 // pred_fallthru
    _
  // Predicated region
  $region6: #{tpu_custom_call.1} parent=0 // pred_check
    _
  $region7: #{tpu_custom_call.1} parent=0 // pred_check_branch
    %16 = sbr.rel (0) target = $region9
  $region8: #{tpu_custom_call.1} parent=0 // pred_region
    _
  $region9: #{tpu_custom_call.1} parent=0 // pred_fallthru
    _
  // Predicated region
  $region10: #{tpu_custom_call.1} parent=0 // pred_check
    _
  $region11: #{tpu_custom_call.1} parent=0 // pred_check_branch
    %18 = sbr.rel (0) target = $region13
  $region12: #{tpu_custom_call.1} parent=0 // pred_region
    _
  $region13: #{tpu_custom_call.1} parent=0 // pred_fallthru
    _
  // Predicated region
  $region14: #{tpu_custom_call.1} parent=0 // pred_check
    _
  $region15: #{tpu_custom_call.1} parent=0 // pred_check_branch
    %20 = sbr.rel (0) target = $region17
  $region16: #{tpu_custom_call.1} parent=0 // pred_region
    _
  $region17: #{tpu_custom_call.1} parent=0 // pred_fallthru
    _
  // Predicated region
  $region18: #{tpu_custom_call.1} parent=0 // pred_check
    _
  $region19: #{tpu_custom_call.1} parent=0 // pred_check_branch
    %22 = sbr.rel (0) target = $region21
  $region20: #{tpu_custom_call.1} parent=0 // pred_region
    _
  $region21: #{tpu_custom_call.1} parent=0 // pred_fallthru
    _
  // Predicated region
  $region22: #{tpu_custom_call.1} parent=0 // pred_check
    _
  $region23: #{tpu_custom_call.1} parent=0 // pred_check_branch
    %24 = sbr.rel (0) target = $region25
  $region24: #{tpu_custom_call.1} parent=0 // pred_region
    _
  $region25: #{tpu_custom_call.1} parent=0 // pred_fallthru
    _
  // Predicated region
  $region26: #{tpu_custom_call.1} parent=0 // pred_check
    _
  $region27: #{tpu_custom_call.1} parent=0 // pred_check_branch
    %26 = sbr.rel (0) target = $region29
  $region28: #{tpu_custom_call.1} parent=0 // pred_region
    _
  $region29: #{tpu_custom_call.1} parent=0 // pred_fallthru
    _
  %v28 = vld [vmem:[%s0] sm:$0xf]
  %v29 = vld [vmem:[%s0 + $0x4] sm:$0xf]
  %v30 = vld [vmem:[%s0 + $0x8] sm:$0xf]
  %v31 = vld [vmem:[%s0 + $0xc] sm:$0xf]
  %v32 = vld [vmem:[%s0 + $0x10] sm:$0xf]
  %v33 = vld [vmem:[%s0 + $0x14] sm:$0xf]
  %v34 = vld [vmem:[%s0 + $0x18] sm:$0xf]
  %v35 = vld [vmem:[%s0 + $0x1c] sm:$0xf]
  %v36 = vld [vmem:[%s0 + $0x20] sm:$0xf]
  %v37 = vld [vmem:[%s0 + $0x24] sm:$0xf]
  %v38 = vld [vmem:[%s0 + $0x28] sm:$0xf]
  %v39 = vld [vmem:[%s0 + $0x2c] sm:$0xf]
  %v40 = vld [vmem:[%s0 + $0x30] sm:$0xf]
  %v41 = vld [vmem:[%s0 + $0x34] sm:$0xf]
  %v42 = vld [vmem:[%s0 + $0x38] sm:$0xf]
  %v43 = vld [vmem:[%s0 + $0x3c] sm:$0xf]
  %v44 = vld [vmem:[%s0 + $0x40] sm:$0xf]
  %v45 = vld [vmem:[%s0 + $0x44] sm:$0xf]
  %v46 = vld [vmem:[%s0 + $0x48] sm:$0xf]
  %v47 = vld [vmem:[%s0 + $0x4c] sm:$0xf]
  %v48 = vld [vmem:[%s0 + $0x50] sm:$0xf]
  %v49 = vld [vmem:[%s0 + $0x54] sm:$0xf]
  %v50 = vld [vmem:[%s0 + $0x58] sm:$0xf]
  %v51 = vld [vmem:[%s0 + $0x5c] sm:$0xf]
  %v52 = vld [vmem:[%s0 + $0x60] sm:$0xf]
  %v53 = vld [vmem:[%s0 + $0x64] sm:$0xf]
  %v54 = vld [vmem:[%s0 + $0x68] sm:$0xf]
  %v55 = vld [vmem:[%s0 + $0x6c] sm:$0xf]
  %v56 = vld [vmem:[%s0 + $0x70] sm:$0xf]
  %v57 = vld [vmem:[%s0 + $0x74] sm:$0xf]
  %v58 = vld [vmem:[%s0 + $0x78] sm:$0xf]
  %v59 = vld [vmem:[%s0 + $0x7c] sm:$0xf]
  %v60 = vld [vmem:[%s1] sm:$0xf]
  %v61 = vld [vmem:[%s1 + $0x4] sm:$0xf]
  %v62 = vld [vmem:[%s2] sm:$0x1]
  %v64 = vlaneseq
  %v65 = vshrl.u32 %v64, 7
  %v66 = vsub.s32 0, %v65
  %v67 = vrot.slane %v62, %v66
  %v101 = vunpack.c.l.b16 %v28
  %v102 = vunpack.c.l.b16 %v29
  %v103 = vunpack.c.l.b16 %v30
  %v104 = vunpack.c.l.b16 %v31
  %v105 = vunpack.c.l.b16 %v32
  %v106 = vunpack.c.l.b16 %v33
  %v107 = vunpack.c.l.b16 %v34
  %v108 = vunpack.c.l.b16 %v35
  %v109 = vunpack.c.l.b16 %v36
  %v110 = vunpack.c.l.b16 %v37
  %v111 = vunpack.c.l.b16 %v38
  %v112 = vunpack.c.l.b16 %v39
  %v113 = vunpack.c.l.b16 %v40
  %v114 = vunpack.c.l.b16 %v41
  %v115 = vunpack.c.l.b16 %v42
  %v116 = vunpack.c.l.b16 %v43
  %v117 = vunpack.c.l.b16 %v44
  %v118 = vunpack.c.l.b16 %v45
  %v119 = vunpack.c.l.b16 %v46
  %v120 = vunpack.c.l.b16 %v47
  %v121 = vunpack.c.l.b16 %v48
  %v122 = vunpack.c.l.b16 %v49
  %v123 = vunpack.c.l.b16 %v50
  %v124 = vunpack.c.l.b16 %v51
  %v125 = vunpack.c.l.b16 %v52
  %v126 = vunpack.c.l.b16 %v53
  %v127 = vunpack.c.l.b16 %v54
  %v128 = vunpack.c.l.b16 %v55
  %v129 = vunpack.c.l.b16 %v56
  %v130 = vunpack.c.l.b16 %v57
  %v131 = vunpack.c.l.b16 %v58
  %v132 = vunpack.c.l.b16 %v59
  %v133 = vpack.c.b16 %v102, %v101
  %v134 = vpack.c.b16 %v104, %v103
  %v135 = vpack.c.b16 %v106, %v105
  %v136 = vpack.c.b16 %v108, %v107
  %v137 = vpack.c.b16 %v110, %v109
  %v138 = vpack.c.b16 %v112, %v111
  %v139 = vpack.c.b16 %v114, %v113
  %v140 = vpack.c.b16 %v116, %v115
  %v141 = vpack.c.b16 %v118, %v117
  %v142 = vpack.c.b16 %v120, %v119
  %v143 = vpack.c.b16 %v122, %v121
  %v144 = vpack.c.b16 %v124, %v123
  %v145 = vpack.c.b16 %v126, %v125
  %v146 = vpack.c.b16 %v128, %v127
  %v147 = vpack.c.b16 %v130, %v129
  %v148 = vpack.c.b16 %v132, %v131
  %v151 = vunpack.c.l.b16 %v60
  %v152 = vunpack.c.l.b16 %v61
  %v153 = vpack.c.b16 %v152, %v151
  %vm155 = vcmask 130048
  %v157 = vsel %vm155, %v133, 0
  %v160 = vsel %vm155, %v134, 0
  %v163 = vsel %vm155, %v135, 0
  %v166 = vsel %vm155, %v136, 0
  %v169 = vsel %vm155, %v137, 0
  %v172 = vsel %vm155, %v138, 0
  %v175 = vsel %vm155, %v139, 0
  %v178 = vsel %vm155, %v140, 0
  %v181 = vsel %vm155, %v141, 0
  %v184 = vsel %vm155, %v142, 0
  %v187 = vsel %vm155, %v143, 0
  %v190 = vsel %vm155, %v144, 0
  %v193 = vsel %vm155, %v145, 0
  %v196 = vsel %vm155, %v146, 0
  %v199 = vsel %vm155, %v147, 0
  %v202 = vsel %vm155, %v148, 0
  %204 = vmatprep.subr.bf16.mxu0 0
  %205 = vmatpush1.bf16.msra.mxu0 0
  %206 = vmatprep.subr.bf16.mxu0 0
  %207 = vmatpush1.bf16.msra.mxu0 0
  %208 = vmatprep.subr.bf16.mxu0 0
  %209 = vmatpush1.bf16.msra.mxu0 0
  %210 = vmatprep.subr.bf16.mxu0 0
  %211 = vmatpush1.bf16.msra.mxu0 0
  %212 = vmatprep.subr.bf16.mxu0 0
  %213 = vmatpush1.bf16.msra.mxu0 0
  %214 = vmatprep.subr.bf16.mxu0 0
  %215 = vmatpush1.bf16.msra.mxu0 0
  %216 = vmatprep.subr.bf16.mxu0 0
  %217 = vmatpush1.bf16.msra.mxu0 0
  %218 = vmatprep.subr.bf16.mxu0 0
  %219 = vmatpush1.bf16.msra.mxu0 %v153
  %220 = vmatprep.subr.bf16.mxu0 0
  %221 = vmatpush2.bf16.msra.mxu0 0
  %222 = vmatprep.subr.bf16.mxu0 0
  %223 = vmatpush2.bf16.msra.mxu0 0
  %224 = vmatprep.subr.bf16.mxu0 0
  %225 = vmatpush2.bf16.msra.mxu0 0
  %226 = vmatprep.subr.bf16.mxu0 0
  %227 = vmatpush2.bf16.msra.mxu0 0
  %228 = vmatprep.subr.bf16.mxu0 0
  %229 = vmatpush2.bf16.msra.mxu0 0
  %230 = vmatprep.subr.bf16.mxu0 0
  %231 = vmatpush2.bf16.msra.mxu0 0
  %232 = vmatprep.subr.bf16.mxu0 0
  %233 = vmatpush2.bf16.msra.mxu0 0
  %234 = vmatprep.subr.bf16.mxu0 0
  %235 = vmatpush2.bf16.msra.mxu0 0
  %236 = vmatprep.mubr.bf16.mxu0 0
  %237 = vmatmul.mubr.bf16.gmra.mxu0 %v157
  %v238 = vpop.f32.mrf.mxu0
  %v239 = vadd.f32 %v67, %v238
  %v240 = vpop.f32.mrf.mxu0
  %v241 = vpop.f32.mrf.mxu0
  %v242 = vadd.f32 %v67, %v241
  %v243 = vpop.f32.mrf.mxu0
  %244 = vmatprep.mubr.bf16.mxu0 0
  %245 = vmatmul.mubr.bf16.gmra.mxu0 %v160
  %v246 = vpop.f32.mrf.mxu0
  %v247 = vadd.f32 %v67, %v246
  %v248 = vpop.f32.mrf.mxu0
  %v249 = vpop.f32.mrf.mxu0
  %v250 = vadd.f32 %v67, %v249
  %v251 = vpop.f32.mrf.mxu0
  %252 = vmatprep.mubr.bf16.mxu0 0
  %253 = vmatmul.mubr.bf16.gmra.mxu0 %v163
  %v254 = vpop.f32.mrf.mxu0
  %v255 = vadd.f32 %v67, %v254
  %v256 = vpop.f32.mrf.mxu0
  %v257 = vpop.f32.mrf.mxu0
  %v258 = vadd.f32 %v67, %v257
  %v259 = vpop.f32.mrf.mxu0
  %260 = vmatprep.mubr.bf16.mxu0 0
  %261 = vmatmul.mubr.bf16.gmra.mxu0 %v166
  %v262 = vpop.f32.mrf.mxu0
  %v263 = vadd.f32 %v67, %v262
  %v264 = vpop.f32.mrf.mxu0
  %v265 = vpop.f32.mrf.mxu0
  %v266 = vadd.f32 %v67, %v265
  %v267 = vpop.f32.mrf.mxu0
  %268 = vmatprep.mubr.bf16.mxu0 0
  %269 = vmatmul.mubr.bf16.gmra.mxu0 %v169
  %v270 = vpop.f32.mrf.mxu0
  %v271 = vadd.f32 %v67, %v270
  %v272 = vpop.f32.mrf.mxu0
  %v273 = vpop.f32.mrf.mxu0
  %v274 = vadd.f32 %v67, %v273
  %v275 = vpop.f32.mrf.mxu0
  %276 = vmatprep.mubr.bf16.mxu0 0
  %277 = vmatmul.mubr.bf16.gmra.mxu0 %v172
  %v278 = vpop.f32.mrf.mxu0
  %v279 = vadd.f32 %v67, %v278
  %v280 = vpop.f32.mrf.mxu0
  %v281 = vpop.f32.mrf.mxu0
  %v282 = vadd.f32 %v67, %v281
  %v283 = vpop.f32.mrf.mxu0
  %284 = vmatprep.mubr.bf16.mxu0 0
  %285 = vmatmul.mubr.bf16.gmra.mxu0 %v175
  %v286 = vpop.f32.mrf.mxu0
  %v287 = vadd.f32 %v67, %v286
  %v288 = vpop.f32.mrf.mxu0
  %v289 = vpop.f32.mrf.mxu0
  %v290 = vadd.f32 %v67, %v289
  %v291 = vpop.f32.mrf.mxu0
  %292 = vmatprep.mubr.bf16.mxu0 0
  %293 = vmatmul.mubr.bf16.gmra.mxu0 %v178
  %v294 = vpop.f32.mrf.mxu0
  %v295 = vadd.f32 %v67, %v294
  %v296 = vpop.f32.mrf.mxu0
  %v297 = vpop.f32.mrf.mxu0
  %v298 = vadd.f32 %v67, %v297
  %v299 = vpop.f32.mrf.mxu0
  %300 = vmatprep.mubr.bf16.mxu0 0
  %301 = vmatmul.mubr.bf16.gmra.mxu0 %v181
  %v302 = vpop.f32.mrf.mxu0
  %v303 = vadd.f32 %v67, %v302
  %v304 = vpop.f32.mrf.mxu0
  %v305 = vpop.f32.mrf.mxu0
  %v306 = vadd.f32 %v67, %v305
  %v307 = vpop.f32.mrf.mxu0
  %308 = vmatprep.mubr.bf16.mxu0 0
  %309 = vmatmul.mubr.bf16.gmra.mxu0 %v184
  %v310 = vpop.f32.mrf.mxu0
  %v311 = vadd.f32 %v67, %v310
  %v312 = vpop.f32.mrf.mxu0
  %v313 = vpop.f32.mrf.mxu0
  %v314 = vadd.f32 %v67, %v313
  %v315 = vpop.f32.mrf.mxu0
  %316 = vmatprep.mubr.bf16.mxu0 0
  %317 = vmatmul.mubr.bf16.gmra.mxu0 %v187
  %v318 = vpop.f32.mrf.mxu0
  %v319 = vadd.f32 %v67, %v318
  %v320 = vpop.f32.mrf.mxu0
  %v321 = vpop.f32.mrf.mxu0
  %v322 = vadd.f32 %v67, %v321
  %v323 = vpop.f32.mrf.mxu0
  %324 = vmatprep.mubr.bf16.mxu0 0
  %325 = vmatmul.mubr.bf16.gmra.mxu0 %v190
  %v326 = vpop.f32.mrf.mxu0
  %v327 = vadd.f32 %v67, %v326
  %v328 = vpop.f32.mrf.mxu0
  %v329 = vpop.f32.mrf.mxu0
  %v330 = vadd.f32 %v67, %v329
  %v331 = vpop.f32.mrf.mxu0
  %332 = vmatprep.mubr.bf16.mxu0 0
  %333 = vmatmul.mubr.bf16.gmra.mxu0 %v193
  %v334 = vpop.f32.mrf.mxu0
  %v335 = vadd.f32 %v67, %v334
  %v336 = vpop.f32.mrf.mxu0
  %v337 = vpop.f32.mrf.mxu0
  %v338 = vadd.f32 %v67, %v337
  %v339 = vpop.f32.mrf.mxu0
  %340 = vmatprep.mubr.bf16.mxu0 0
  %341 = vmatmul.mubr.bf16.gmra.mxu0 %v196
  %v342 = vpop.f32.mrf.mxu0
  %v343 = vadd.f32 %v67, %v342
  %v344 = vpop.f32.mrf.mxu0
  %v345 = vpop.f32.mrf.mxu0
  %v346 = vadd.f32 %v67, %v345
  %v347 = vpop.f32.mrf.mxu0
  %348 = vmatprep.mubr.bf16.mxu0 0
  %349 = vmatmul.mubr.bf16.gmra.mxu0 %v199
  %v350 = vpop.f32.mrf.mxu0
  %v351 = vadd.f32 %v67, %v350
  %v352 = vpop.f32.mrf.mxu0
  %v353 = vpop.f32.mrf.mxu0
  %v354 = vadd.f32 %v67, %v353
  %v355 = vpop.f32.mrf.mxu0
  %356 = vmatprep.mubr.bf16.mxu0 0
  %357 = vmatmul.mubr.bf16.gmra.mxu0 %v202
  %v358 = vpop.f32.mrf.mxu0
  %v359 = vadd.f32 %v67, %v358
  %v360 = vpop.f32.mrf.mxu0
  %v361 = vpop.f32.mrf.mxu0
  %v362 = vadd.f32 %v67, %v361
  %v363 = vpop.f32.mrf.mxu0
  %364 = vdwg.mxu0
  %v365 = vmax.f32 %v239, 0.0
  %v366 = vmax.f32 %v242, 0.0
  %v367 = vmax.f32 %v247, 0.0
  %v368 = vmax.f32 %v250, 0.0
  %v369 = vmax.f32 %v255, 0.0
  %v370 = vmax.f32 %v258, 0.0
  %v371 = vmax.f32 %v263, 0.0
  %v372 = vmax.f32 %v266, 0.0
  %v373 = vmax.f32 %v271, 0.0
  %v374 = vmax.f32 %v274, 0.0
  %v375 = vmax.f32 %v279, 0.0
  %v376 = vmax.f32 %v282, 0.0
  %v377 = vmax.f32 %v287, 0.0
  %v378 = vmax.f32 %v290, 0.0
  %v379 = vmax.f32 %v295, 0.0
  %v380 = vmax.f32 %v298, 0.0
  %v381 = vmax.f32 %v303, 0.0
  %v382 = vmax.f32 %v306, 0.0
  %v383 = vmax.f32 %v311, 0.0
  %v384 = vmax.f32 %v314, 0.0
  %v385 = vmax.f32 %v319, 0.0
  %v386 = vmax.f32 %v322, 0.0
  %v387 = vmax.f32 %v327, 0.0
  %v388 = vmax.f32 %v330, 0.0
  %v389 = vmax.f32 %v335, 0.0
  %v390 = vmax.f32 %v338, 0.0
  %v391 = vmax.f32 %v343, 0.0
  %v392 = vmax.f32 %v346, 0.0
  %v393 = vmax.f32 %v351, 0.0
  %v394 = vmax.f32 %v354, 0.0
  %v395 = vmax.f32 %v359, 0.0
  %v396 = vmax.f32 %v362, 0.0
  %v397 = vpack.c.bf16 %v366, %v365
  %v398 = vpack.c.bf16 %v368, %v367
  %v399 = vpack.c.bf16 %v370, %v369
  %v400 = vpack.c.bf16 %v372, %v371
  %v401 = vpack.c.bf16 %v374, %v373
  %v402 = vpack.c.bf16 %v376, %v375
  %v403 = vpack.c.bf16 %v378, %v377
  %v404 = vpack.c.bf16 %v380, %v379
  %v405 = vpack.c.bf16 %v382, %v381
  %v406 = vpack.c.bf16 %v384, %v383
  %v407 = vpack.c.bf16 %v386, %v385
  %v408 = vpack.c.bf16 %v388, %v387
  %v409 = vpack.c.bf16 %v390, %v389
  %v410 = vpack.c.bf16 %v392, %v391
  %v411 = vpack.c.bf16 %v394, %v393
  %v412 = vpack.c.bf16 %v396, %v395
  %v413 = vld [vmem:[%s3] sm:$0xf]
  %v414 = vld [vmem:[%s3 + $0x4] sm:$0xf]
  %v415 = vld [vmem:[%s3 + $0x8] sm:$0xf]
  %v416 = vld [vmem:[%s3 + $0xc] sm:$0xf]
  %v417 = vld [vmem:[%s3 + $0x10] sm:$0xf]
  %v418 = vld [vmem:[%s3 + $0x14] sm:$0xf]
  %v419 = vld [vmem:[%s3 + $0x18] sm:$0xf]
  %v420 = vld [vmem:[%s3 + $0x1c] sm:$0xf]
  %v421 = vld [vmem:[%s3 + $0x20] sm:$0xf]
  %v422 = vld [vmem:[%s3 + $0x24] sm:$0xf]
  %v423 = vld [vmem:[%s3 + $0x28] sm:$0xf]
  %v424 = vld [vmem:[%s3 + $0x2c] sm:$0xf]
  %v425 = vld [vmem:[%s3 + $0x30] sm:$0xf]
  %v426 = vld [vmem:[%s3 + $0x34] sm:$0xf]
  %v427 = vld [vmem:[%s3 + $0x38] sm:$0xf]
  %v428 = vld [vmem:[%s3 + $0x3c] sm:$0xf]
  %v429 = vld [vmem:[%s4] sm:$0x1]
  %v431 = vlaneseq
  %v432 = vshrl.u32 %v431, 7
  %v433 = vsub.s32 0, %v432
  %v434 = vrot.slane %v429, %v433
  %v452 = vunpack.c.l.b16 %v413
  %v453 = vunpack.c.l.b16 %v414
  %v454 = vunpack.c.l.b16 %v415
  %v455 = vunpack.c.l.b16 %v416
  %v456 = vunpack.c.l.b16 %v417
  %v457 = vunpack.c.l.b16 %v418
  %v458 = vunpack.c.l.b16 %v419
  %v459 = vunpack.c.l.b16 %v420
  %v460 = vunpack.c.l.b16 %v421
  %v461 = vunpack.c.l.b16 %v422
  %v462 = vunpack.c.l.b16 %v423
  %v463 = vunpack.c.l.b16 %v424
  %v464 = vunpack.c.l.b16 %v425
  %v465 = vunpack.c.l.b16 %v426
  %v466 = vunpack.c.l.b16 %v427
  %v467 = vunpack.c.l.b16 %v428
  %v468 = vpack.c.b16 %v453, %v452
  %v469 = vpack.c.b16 %v455, %v454
  %v470 = vpack.c.b16 %v457, %v456
  %v471 = vpack.c.b16 %v459, %v458
  %v472 = vpack.c.b16 %v461, %v460
  %v473 = vpack.c.b16 %v463, %v462
  %v474 = vpack.c.b16 %v465, %v464
  %v475 = vpack.c.b16 %v467, %v466
  %484 = vmatprep.subr.bf16.mxu0 0
  %485 = vmatpush1.bf16.msra.mxu0 %v475
  %486 = vmatprep.subr.bf16.mxu0 0
  %487 = vmatpush1.bf16.msra.mxu0 %v474
  %488 = vmatprep.subr.bf16.mxu0 0
  %489 = vmatpush1.bf16.msra.mxu0 %v473
  %490 = vmatprep.subr.bf16.mxu0 0
  %491 = vmatpush1.bf16.msra.mxu0 %v472
  %492 = vmatprep.subr.bf16.mxu0 0
  %493 = vmatpush1.bf16.msra.mxu0 %v471
  %494 = vmatprep.subr.bf16.mxu0 0
  %495 = vmatpush1.bf16.msra.mxu0 %v470
  %496 = vmatprep.subr.bf16.mxu0 0
  %497 = vmatpush1.bf16.msra.mxu0 %v469
  %498 = vmatprep.subr.bf16.mxu0 0
  %499 = vmatpush1.bf16.msra.mxu0 %v468
  %500 = vmatprep.subr.bf16.mxu0 0
  %501 = vmatpush2.bf16.msra.mxu0 0
  %502 = vmatprep.subr.bf16.mxu0 0
  %503 = vmatpush2.bf16.msra.mxu0 0
  %504 = vmatprep.subr.bf16.mxu0 0
  %505 = vmatpush2.bf16.msra.mxu0 0
  %506 = vmatprep.subr.bf16.mxu0 0
  %507 = vmatpush2.bf16.msra.mxu0 0
  %508 = vmatprep.subr.bf16.mxu0 0
  %509 = vmatpush2.bf16.msra.mxu0 0
  %510 = vmatprep.subr.bf16.mxu0 0
  %511 = vmatpush2.bf16.msra.mxu0 0
  %512 = vmatprep.subr.bf16.mxu0 0
  %513 = vmatpush2.bf16.msra.mxu0 0
  %514 = vmatprep.subr.bf16.mxu0 0
  %515 = vmatpush2.bf16.msra.mxu0 0
  %516 = vmatprep.mubr.bf16.mxu0 0
  %517 = vmatmul.mubr.bf16.gmra.mxu0 %v397
  %v518 = vpop.f32.mrf.mxu0
  %v519 = vadd.f32 %v434, %v518
  %v520 = vpop.f32.mrf.mxu0
  %v521 = vpop.f32.mrf.mxu0
  %v522 = vadd.f32 %v434, %v521
  %v523 = vpop.f32.mrf.mxu0
  %524 = vmatprep.mubr.bf16.mxu0 0
  %525 = vmatmul.mubr.bf16.gmra.mxu0 %v398
  %v526 = vpop.f32.mrf.mxu0
  %v527 = vadd.f32 %v434, %v526
  %v528 = vpop.f32.mrf.mxu0
  %v529 = vpop.f32.mrf.mxu0
  %v530 = vadd.f32 %v434, %v529
  %v531 = vpop.f32.mrf.mxu0
  %532 = vmatprep.mubr.bf16.mxu0 0
  %533 = vmatmul.mubr.bf16.gmra.mxu0 %v399
  %v534 = vpop.f32.mrf.mxu0
  %v535 = vadd.f32 %v434, %v534
  %v536 = vpop.f32.mrf.mxu0
  %v537 = vpop.f32.mrf.mxu0
  %v538 = vadd.f32 %v434, %v537
  %v539 = vpop.f32.mrf.mxu0
  %540 = vmatprep.mubr.bf16.mxu0 0
  %541 = vmatmul.mubr.bf16.gmra.mxu0 %v400
  %v542 = vpop.f32.mrf.mxu0
  %v543 = vadd.f32 %v434, %v542
  %v544 = vpop.f32.mrf.mxu0
  %v545 = vpop.f32.mrf.mxu0
  %v546 = vadd.f32 %v434, %v545
  %v547 = vpop.f32.mrf.mxu0
  %548 = vmatprep.mubr.bf16.mxu0 0
  %549 = vmatmul.mubr.bf16.gmra.mxu0 %v401
  %v550 = vpop.f32.mrf.mxu0
  %v551 = vadd.f32 %v434, %v550
  %v552 = vpop.f32.mrf.mxu0
  %v553 = vpop.f32.mrf.mxu0
  %v554 = vadd.f32 %v434, %v553
  %v555 = vpop.f32.mrf.mxu0
  %556 = vmatprep.mubr.bf16.mxu0 0
  %557 = vmatmul.mubr.bf16.gmra.mxu0 %v402
  %v558 = vpop.f32.mrf.mxu0
  %v559 = vadd.f32 %v434, %v558
  %v560 = vpop.f32.mrf.mxu0
  %v561 = vpop.f32.mrf.mxu0
  %v562 = vadd.f32 %v434, %v561
  %v563 = vpop.f32.mrf.mxu0
  %564 = vmatprep.mubr.bf16.mxu0 0
  %565 = vmatmul.mubr.bf16.gmra.mxu0 %v403
  %v566 = vpop.f32.mrf.mxu0
  %v567 = vadd.f32 %v434, %v566
  %v568 = vpop.f32.mrf.mxu0
  %v569 = vpop.f32.mrf.mxu0
  %v570 = vadd.f32 %v434, %v569
  %v571 = vpop.f32.mrf.mxu0
  %572 = vmatprep.mubr.bf16.mxu0 0
  %573 = vmatmul.mubr.bf16.gmra.mxu0 %v404
  %v574 = vpop.f32.mrf.mxu0
  %v575 = vadd.f32 %v434, %v574
  %v576 = vpop.f32.mrf.mxu0
  %v577 = vpop.f32.mrf.mxu0
  %v578 = vadd.f32 %v434, %v577
  %v579 = vpop.f32.mrf.mxu0
  %580 = vmatprep.mubr.bf16.mxu0 0
  %581 = vmatmul.mubr.bf16.gmra.mxu0 %v405
  %v582 = vpop.f32.mrf.mxu0
  %v583 = vadd.f32 %v434, %v582
  %v584 = vpop.f32.mrf.mxu0
  %v585 = vpop.f32.mrf.mxu0
  %v586 = vadd.f32 %v434, %v585
  %v587 = vpop.f32.mrf.mxu0
  %588 = vmatprep.mubr.bf16.mxu0 0
  %589 = vmatmul.mubr.bf16.gmra.mxu0 %v406
  %v590 = vpop.f32.mrf.mxu0
  %v591 = vadd.f32 %v434, %v590
  %v592 = vpop.f32.mrf.mxu0
  %v593 = vpop.f32.mrf.mxu0
  %v594 = vadd.f32 %v434, %v593
  %v595 = vpop.f32.mrf.mxu0
  %596 = vmatprep.mubr.bf16.mxu0 0
  %597 = vmatmul.mubr.bf16.gmra.mxu0 %v407
  %v598 = vpop.f32.mrf.mxu0
  %v599 = vadd.f32 %v434, %v598
  %v600 = vpop.f32.mrf.mxu0
  %v601 = vpop.f32.mrf.mxu0
  %v602 = vadd.f32 %v434, %v601
  %v603 = vpop.f32.mrf.mxu0
  %604 = vmatprep.mubr.bf16.mxu0 0
  %605 = vmatmul.mubr.bf16.gmra.mxu0 %v408
  %v606 = vpop.f32.mrf.mxu0
  %v607 = vadd.f32 %v434, %v606
  %v608 = vpop.f32.mrf.mxu0
  %v609 = vpop.f32.mrf.mxu0
  %v610 = vadd.f32 %v434, %v609
  %v611 = vpop.f32.mrf.mxu0
  %612 = vmatprep.mubr.bf16.mxu0 0
  %613 = vmatmul.mubr.bf16.gmra.mxu0 %v409
  %v614 = vpop.f32.mrf.mxu0
  %v615 = vadd.f32 %v434, %v614
  %v616 = vpop.f32.mrf.mxu0
  %v617 = vpop.f32.mrf.mxu0
  %v618 = vadd.f32 %v434, %v617
  %v619 = vpop.f32.mrf.mxu0
  %620 = vmatprep.mubr.bf16.mxu0 0
  %621 = vmatmul.mubr.bf16.gmra.mxu0 %v410
  %v622 = vpop.f32.mrf.mxu0
  %v623 = vadd.f32 %v434, %v622
  %v624 = vpop.f32.mrf.mxu0
  %v625 = vpop.f32.mrf.mxu0
  %v626 = vadd.f32 %v434, %v625
  %v627 = vpop.f32.mrf.mxu0
  %628 = vmatprep.mubr.bf16.mxu0 0
  %629 = vmatmul.mubr.bf16.gmra.mxu0 %v411
  %v630 = vpop.f32.mrf.mxu0
  %v631 = vadd.f32 %v434, %v630
  %v632 = vpop.f32.mrf.mxu0
  %v633 = vpop.f32.mrf.mxu0
  %v634 = vadd.f32 %v434, %v633
  %v635 = vpop.f32.mrf.mxu0
  %636 = vmatprep.mubr.bf16.mxu0 0
  %637 = vmatmul.mubr.bf16.gmra.mxu0 %v412
  %v638 = vpop.f32.mrf.mxu0
  %v639 = vadd.f32 %v434, %v638
  %v640 = vpop.f32.mrf.mxu0
  %v641 = vpop.f32.mrf.mxu0
  %v642 = vadd.f32 %v434, %v641
  %v643 = vpop.f32.mrf.mxu0
  %644 = vdwg.mxu0
  %v645 = vmax.f32 %v519, 0.0
  %v646 = vmax.f32 %v522, 0.0
  %v647 = vmax.f32 %v527, 0.0
  %v648 = vmax.f32 %v530, 0.0
  %v649 = vmax.f32 %v535, 0.0
  %v650 = vmax.f32 %v538, 0.0
  %v651 = vmax.f32 %v543, 0.0
  %v652 = vmax.f32 %v546, 0.0
  %v653 = vmax.f32 %v551, 0.0
  %v654 = vmax.f32 %v554, 0.0
  %v655 = vmax.f32 %v559, 0.0
  %v656 = vmax.f32 %v562, 0.0
  %v657 = vmax.f32 %v567, 0.0
  %v658 = vmax.f32 %v570, 0.0
  %v659 = vmax.f32 %v575, 0.0
  %v660 = vmax.f32 %v578, 0.0
  %v661 = vmax.f32 %v583, 0.0
  %v662 = vmax.f32 %v586, 0.0
  %v663 = vmax.f32 %v591, 0.0
  %v664 = vmax.f32 %v594, 0.0
  %v665 = vmax.f32 %v599, 0.0
  %v666 = vmax.f32 %v602, 0.0
  %v667 = vmax.f32 %v607, 0.0
  %v668 = vmax.f32 %v610, 0.0
  %v669 = vmax.f32 %v615, 0.0
  %v670 = vmax.f32 %v618, 0.0
  %v671 = vmax.f32 %v623, 0.0
  %v672 = vmax.f32 %v626, 0.0
  %v673 = vmax.f32 %v631, 0.0
  %v674 = vmax.f32 %v634, 0.0
  %v675 = vmax.f32 %v639, 0.0
  %v676 = vmax.f32 %v642, 0.0
  %v677 = vld [vmem:[%s5] sm:$0x1]
  %v679 = vlaneseq
  %v680 = vshrl.u32 %v679, 7
  %v681 = vsub.s32 0, %v680
  %v682 = vrot.slane %v677, %v681
  %v684 = vmul.f32 %v645, %v682
  %v685 = vmul.f32 %v646, %v682
  %v686 = vmul.f32 %v647, %v682
  %v687 = vmul.f32 %v648, %v682
  %v688 = vmul.f32 %v649, %v682
  %v689 = vmul.f32 %v650, %v682
  %v690 = vmul.f32 %v651, %v682
  %v691 = vmul.f32 %v652, %v682
  %v692 = vmul.f32 %v653, %v682
  %v693 = vmul.f32 %v654, %v682
  %v694 = vmul.f32 %v655, %v682
  %v695 = vmul.f32 %v656, %v682
  %v696 = vmul.f32 %v657, %v682
  %v697 = vmul.f32 %v658, %v682
  %v698 = vmul.f32 %v659, %v682
  %v699 = vmul.f32 %v660, %v682
  %v700 = vmul.f32 %v661, %v682
  %v701 = vmul.f32 %v662, %v682
  %v702 = vmul.f32 %v663, %v682
  %v703 = vmul.f32 %v664, %v682
  %v704 = vmul.f32 %v665, %v682
  %v705 = vmul.f32 %v666, %v682
  %v706 = vmul.f32 %v667, %v682
  %v707 = vmul.f32 %v668, %v682
  %v708 = vmul.f32 %v669, %v682
  %v709 = vmul.f32 %v670, %v682
  %v710 = vmul.f32 %v671, %v682
  %v711 = vmul.f32 %v672, %v682
  %v712 = vmul.f32 %v673, %v682
  %v713 = vmul.f32 %v674, %v682
  %v714 = vmul.f32 %v675, %v682
  %v715 = vmul.f32 %v676, %v682
  %716 = vadd.xlane.f32.xlu0 %v684
  %v717 = vpop.xlane.xlu0 %716
  %718 = vadd.xlane.f32.xlu0 %v685
  %v719 = vpop.xlane.xlu0 %718
  %720 = vadd.xlane.f32.xlu0 %v686
  %v721 = vpop.xlane.xlu0 %720
  %722 = vadd.xlane.f32.xlu0 %v687
  %v723 = vpop.xlane.xlu0 %722
  %724 = vadd.xlane.f32.xlu0 %v688
  %v725 = vpop.xlane.xlu0 %724
  %726 = vadd.xlane.f32.xlu0 %v689
  %v727 = vpop.xlane.xlu0 %726
  %728 = vadd.xlane.f32.xlu0 %v690
  %v729 = vpop.xlane.xlu0 %728
  %730 = vadd.xlane.f32.xlu0 %v691
  %v731 = vpop.xlane.xlu0 %730
  %732 = vadd.xlane.f32.xlu0 %v692
  %v733 = vpop.xlane.xlu0 %732
  %734 = vadd.xlane.f32.xlu0 %v693
  %v735 = vpop.xlane.xlu0 %734
  %736 = vadd.xlane.f32.xlu0 %v694
  %v737 = vpop.xlane.xlu0 %736
  %738 = vadd.xlane.f32.xlu0 %v695
  %v739 = vpop.xlane.xlu0 %738
  %740 = vadd.xlane.f32.xlu0 %v696
  %v741 = vpop.xlane.xlu0 %740
  %742 = vadd.xlane.f32.xlu0 %v697
  %v743 = vpop.xlane.xlu0 %742
  %744 = vadd.xlane.f32.xlu0 %v698
  %v745 = vpop.xlane.xlu0 %744
  %746 = vadd.xlane.f32.xlu0 %v699
  %v747 = vpop.xlane.xlu0 %746
  %748 = vadd.xlane.f32.xlu0 %v700
  %v749 = vpop.xlane.xlu0 %748
  %750 = vadd.xlane.f32.xlu0 %v701
  %v751 = vpop.xlane.xlu0 %750
  %752 = vadd.xlane.f32.xlu0 %v702
  %v753 = vpop.xlane.xlu0 %752
  %754 = vadd.xlane.f32.xlu0 %v703
  %v755 = vpop.xlane.xlu0 %754
  %756 = vadd.xlane.f32.xlu0 %v704
  %v757 = vpop.xlane.xlu0 %756
  %758 = vadd.xlane.f32.xlu0 %v705
  %v759 = vpop.xlane.xlu0 %758
  %760 = vadd.xlane.f32.xlu0 %v706
  %v761 = vpop.xlane.xlu0 %760
  %762 = vadd.xlane.f32.xlu0 %v707
  %v763 = vpop.xlane.xlu0 %762
  %764 = vadd.xlane.f32.xlu0 %v708
  %v765 = vpop.xlane.xlu0 %764
  %766 = vadd.xlane.f32.xlu0 %v709
  %v767 = vpop.xlane.xlu0 %766
  %768 = vadd.xlane.f32.xlu0 %v710
  %v769 = vpop.xlane.xlu0 %768
  %770 = vadd.xlane.f32.xlu0 %v711
  %v771 = vpop.xlane.xlu0 %770
  %772 = vadd.xlane.f32.xlu0 %v712
  %v773 = vpop.xlane.xlu0 %772
  %774 = vadd.xlane.f32.xlu0 %v713
  %v775 = vpop.xlane.xlu0 %774
  %776 = vadd.xlane.f32.xlu0 %v714
  %v777 = vpop.xlane.xlu0 %776
  %778 = vadd.xlane.f32.xlu0 %v715
  %v779 = vpop.xlane.xlu0 %778
  %s780 = sld [smem:[#allocation2]]
  %v781 = vstv %s780
  %v782 = vadd.f32 %v717, %v781
  %v783 = vadd.f32 %v719, %v781
  %v784 = vadd.f32 %v721, %v781
  %v785 = vadd.f32 %v723, %v781
  %v786 = vadd.f32 %v725, %v781
  %v787 = vadd.f32 %v727, %v781
  %v788 = vadd.f32 %v729, %v781
  %v789 = vadd.f32 %v731, %v781
  %v790 = vadd.f32 %v733, %v781
  %v791 = vadd.f32 %v735, %v781
  %v792 = vadd.f32 %v737, %v781
  %v793 = vadd.f32 %v739, %v781
  %v794 = vadd.f32 %v741, %v781
  %v795 = vadd.f32 %v743, %v781
  %v796 = vadd.f32 %v745, %v781
  %v797 = vadd.f32 %v747, %v781
  %v798 = vadd.f32 %v749, %v781
  %v799 = vadd.f32 %v751, %v781
  %v800 = vadd.f32 %v753, %v781
  %v801 = vadd.f32 %v755, %v781
  %v802 = vadd.f32 %v757, %v781
  %v803 = vadd.f32 %v759, %v781
  %v804 = vadd.f32 %v761, %v781
  %v805 = vadd.f32 %v763, %v781
  %v806 = vadd.f32 %v765, %v781
  %v807 = vadd.f32 %v767, %v781
  %v808 = vadd.f32 %v769, %v781
  %v809 = vadd.f32 %v771, %v781
  %v810 = vadd.f32 %v773, %v781
  %v811 = vadd.f32 %v775, %v781
  %v812 = vadd.f32 %v777, %v781
  %v813 = vadd.f32 %v779, %v781
  %v814 = vsub.f32 0.0, %v782
  %v815 = vsub.f32 0.0, %v783
  %v816 = vsub.f32 0.0, %v784
  %v817 = vsub.f32 0.0, %v785
  %v818 = vsub.f32 0.0, %v786
  %v819 = vsub.f32 0.0, %v787
  %v820 = vsub.f32 0.0, %v788
  %v821 = vsub.f32 0.0, %v789
  %v822 = vsub.f32 0.0, %v790
  %v823 = vsub.f32 0.0, %v791
  %v824 = vsub.f32 0.0, %v792
  %v825 = vsub.f32 0.0, %v793
  %v826 = vsub.f32 0.0, %v794
  %v827 = vsub.f32 0.0, %v795
  %v828 = vsub.f32 0.0, %v796
  %v829 = vsub.f32 0.0, %v797
  %v830 = vsub.f32 0.0, %v798
  %v831 = vsub.f32 0.0, %v799
  %v832 = vsub.f32 0.0, %v800
  %v833 = vsub.f32 0.0, %v801
  %v834 = vsub.f32 0.0, %v802
  %v835 = vsub.f32 0.0, %v803
  %v836 = vsub.f32 0.0, %v804
  %v837 = vsub.f32 0.0, %v805
  %v838 = vsub.f32 0.0, %v806
  %v839 = vsub.f32 0.0, %v807
  %v840 = vsub.f32 0.0, %v808
  %v841 = vsub.f32 0.0, %v809
  %v842 = vsub.f32 0.0, %v810
  %v843 = vsub.f32 0.0, %v811
  %v844 = vsub.f32 0.0, %v812
  %v845 = vsub.f32 0.0, %v813
  %v846 = vmul.f32 %v814, 1.442695
  %v847 = vpow.pop %v846
  %v848 = vmul.f32 %v815, 1.442695
  %v849 = vpow.pop %v848
  %v850 = vmul.f32 %v816, 1.442695
  %v851 = vpow.pop %v850
  %v852 = vmul.f32 %v817, 1.442695
  %v853 = vpow.pop %v852
  %v854 = vmul.f32 %v818, 1.442695
  %v855 = vpow.pop %v854
  %v856 = vmul.f32 %v819, 1.442695
  %v857 = vpow.pop %v856
  %v858 = vmul.f32 %v820, 1.442695
  %v859 = vpow.pop %v858
  %v860 = vmul.f32 %v821, 1.442695
  %v861 = vpow.pop %v860
  %v862 = vmul.f32 %v822, 1.442695
  %v863 = vpow.pop %v862
  %v864 = vmul.f32 %v823, 1.442695
  %v865 = vpow.pop %v864
  %v866 = vmul.f32 %v824, 1.442695
  %v867 = vpow.pop %v866
  %v868 = vmul.f32 %v825, 1.442695
  %v869 = vpow.pop %v868
  %v870 = vmul.f32 %v826, 1.442695
  %v871 = vpow.pop %v870
  %v872 = vmul.f32 %v827, 1.442695
  %v873 = vpow.pop %v872
  %v874 = vmul.f32 %v828, 1.442695
  %v875 = vpow.pop %v874
  %v876 = vmul.f32 %v829, 1.442695
  %v877 = vpow.pop %v876
  %v878 = vmul.f32 %v830, 1.442695
  %v879 = vpow.pop %v878
  %v880 = vmul.f32 %v831, 1.442695
  %v881 = vpow.pop %v880
  %v882 = vmul.f32 %v832, 1.442695
  %v883 = vpow.pop %v882
  %v884 = vmul.f32 %v833, 1.442695
  %v885 = vpow.pop %v884
  %v886 = vmul.f32 %v834, 1.442695
  %v887 = vpow.pop %v886
  %v888 = vmul.f32 %v835, 1.442695
  %v889 = vpow.pop %v888
  %v890 = vmul.f32 %v836, 1.442695
  %v891 = vpow.pop %v890
  %v892 = vmul.f32 %v837, 1.442695
  %v893 = vpow.pop %v892
  %v894 = vmul.f32 %v838, 1.442695
  %v895 = vpow.pop %v894
  %v896 = vmul.f32 %v839, 1.442695
  %v897 = vpow.pop %v896
  %v898 = vmul.f32 %v840, 1.442695
  %v899 = vpow.pop %v898
  %v900 = vmul.f32 %v841, 1.442695
  %v901 = vpow.pop %v900
  %v902 = vmul.f32 %v842, 1.442695
  %v903 = vpow.pop %v902
  %v904 = vmul.f32 %v843, 1.442695
  %v905 = vpow.pop %v904
  %v906 = vmul.f32 %v844, 1.442695
  %v907 = vpow.pop %v906
  %v908 = vmul.f32 %v845, 1.442695
  %v909 = vpow.pop %v908
  %v910 = vadd.f32 %v847, 1.0
  %v911 = vadd.f32 %v849, 1.0
  %v912 = vadd.f32 %v851, 1.0
  %v913 = vadd.f32 %v853, 1.0
  %v914 = vadd.f32 %v855, 1.0
  %v915 = vadd.f32 %v857, 1.0
  %v916 = vadd.f32 %v859, 1.0
  %v917 = vadd.f32 %v861, 1.0
  %v918 = vadd.f32 %v863, 1.0
  %v919 = vadd.f32 %v865, 1.0
  %v920 = vadd.f32 %v867, 1.0
  %v921 = vadd.f32 %v869, 1.0
  %v922 = vadd.f32 %v871, 1.0
  %v923 = vadd.f32 %v873, 1.0
  %v924 = vadd.f32 %v875, 1.0
  %v925 = vadd.f32 %v877, 1.0
  %v926 = vadd.f32 %v879, 1.0
  %v927 = vadd.f32 %v881, 1.0
  %v928 = vadd.f32 %v883, 1.0
  %v929 = vadd.f32 %v885, 1.0
  %v930 = vadd.f32 %v887, 1.0
  %v931 = vadd.f32 %v889, 1.0
  %v932 = vadd.f32 %v891, 1.0
  %v933 = vadd.f32 %v893, 1.0
  %v934 = vadd.f32 %v895, 1.0
  %v935 = vadd.f32 %v897, 1.0
  %v936 = vadd.f32 %v899, 1.0
  %v937 = vadd.f32 %v901, 1.0
  %v938 = vadd.f32 %v903, 1.0
  %v939 = vadd.f32 %v905, 1.0
  %v940 = vadd.f32 %v907, 1.0
  %v941 = vadd.f32 %v909, 1.0
  %v942 = vrcp.pop %v910
  %v943 = vrcp.pop %v911
  %v944 = vrcp.pop %v912
  %v945 = vrcp.pop %v913
  %v946 = vrcp.pop %v914
  %v947 = vrcp.pop %v915
  %v948 = vrcp.pop %v916
  %v949 = vrcp.pop %v917
  %v950 = vrcp.pop %v918
  %v951 = vrcp.pop %v919
  %v952 = vrcp.pop %v920
  %v953 = vrcp.pop %v921
  %v954 = vrcp.pop %v922
  %v955 = vrcp.pop %v923
  %v956 = vrcp.pop %v924
  %v957 = vrcp.pop %v925
  %v958 = vrcp.pop %v926
  %v959 = vrcp.pop %v927
  %v960 = vrcp.pop %v928
  %v961 = vrcp.pop %v929
  %v962 = vrcp.pop %v930
  %v963 = vrcp.pop %v931
  %v964 = vrcp.pop %v932
  %v965 = vrcp.pop %v933
  %v966 = vrcp.pop %v934
  %v967 = vrcp.pop %v935
  %v968 = vrcp.pop %v936
  %v969 = vrcp.pop %v937
  %v970 = vrcp.pop %v938
  %v971 = vrcp.pop %v939
  %v972 = vrcp.pop %v940
  %v973 = vrcp.pop %v941
  %vm974 = vcmask 7168
  %975 = vst.msk [vmem:[%s7] sm:$0xff] %vm974, %v942
  %976 = vst.msk [vmem:[%s7 + $0x8] sm:$0xff] %vm974, %v943
  %977 = vst.msk [vmem:[%s7 + $0x10] sm:$0xff] %vm974, %v944
  %978 = vst.msk [vmem:[%s7 + $0x18] sm:$0xff] %vm974, %v945
  %979 = vst.msk [vmem:[%s7 + $0x20] sm:$0xff] %vm974, %v946
  %980 = vst.msk [vmem:[%s7 + $0x28] sm:$0xff] %vm974, %v947
  %981 = vst.msk [vmem:[%s7 + $0x30] sm:$0xff] %vm974, %v948
  %982 = vst.msk [vmem:[%s7 + $0x38] sm:$0xff] %vm974, %v949
  %983 = vst.msk [vmem:[%s7 + $0x40] sm:$0xff] %vm974, %v950
  %984 = vst.msk [vmem:[%s7 + $0x48] sm:$0xff] %vm974, %v951
  %985 = vst.msk [vmem:[%s7 + $0x50] sm:$0xff] %vm974, %v952
  %986 = vst.msk [vmem:[%s7 + $0x58] sm:$0xff] %vm974, %v953
  %987 = vst.msk [vmem:[%s7 + $0x60] sm:$0xff] %vm974, %v954
  %988 = vst.msk [vmem:[%s7 + $0x68] sm:$0xff] %vm974, %v955
  %989 = vst.msk [vmem:[%s7 + $0x70] sm:$0xff] %vm974, %v956
  %990 = vst.msk [vmem:[%s7 + $0x78] sm:$0xff] %vm974, %v957
  %991 = vst.msk [vmem:[%s7 + $0x80] sm:$0xff] %vm974, %v958
  %992 = vst.msk [vmem:[%s7 + $0x88] sm:$0xff] %vm974, %v959
  %993 = vst.msk [vmem:[%s7 + $0x90] sm:$0xff] %vm974, %v960
  %994 = vst.msk [vmem:[%s7 + $0x98] sm:$0xff] %vm974, %v961
  %995 = vst.msk [vmem:[%s7 + $0xa0] sm:$0xff] %vm974, %v962
  %996 = vst.msk [vmem:[%s7 + $0xa8] sm:$0xff] %vm974, %v963
  %997 = vst.msk [vmem:[%s7 + $0xb0] sm:$0xff] %vm974, %v964
  %998 = vst.msk [vmem:[%s7 + $0xb8] sm:$0xff] %vm974, %v965
  %999 = vst.msk [vmem:[%s7 + $0xc0] sm:$0xff] %vm974, %v966
  %1000 = vst.msk [vmem:[%s7 + $0xc8] sm:$0xff] %vm974, %v967
  %1001 = vst.msk [vmem:[%s7 + $0xd0] sm:$0xff] %vm974, %v968
  %1002 = vst.msk [vmem:[%s7 + $0xd8] sm:$0xff] %vm974, %v969
  %1003 = vst.msk [vmem:[%s7 + $0xe0] sm:$0xff] %vm974, %v970
  %1004 = vst.msk [vmem:[%s7 + $0xe8] sm:$0xff] %vm974, %v971
  %1005 = vst.msk [vmem:[%s7 + $0xf0] sm:$0xff] %vm974, %v972
  %1006 = vst.msk [vmem:[%s7 + $0xf8] sm:$0xff] %vm974, %v973
  // Predicated region
  $region30: #{tpu_custom_call.1} parent=0 // pred_check
    _
  $region31: #{tpu_custom_call.1} parent=0 // pred_check_branch
    %1008 = sbr.rel (0) target = $region33
  $region32: #{tpu_custom_call.1} parent=0 // pred_region
    _
  $region33: #{tpu_custom_call.1} parent=0 // pred_fallthru
    _
  // Predicated region
  $region34: #{tpu_custom_call.1} parent=0 // pred_check
    _
  $region35: #{tpu_custom_call.1} parent=0 // pred_check_branch
    %1010 = sbr.rel (0) target = $region37
  $region36: #{tpu_custom_call.1} parent=0 // pred_region
    _
  $region37: #{tpu_custom_call.1} parent=0 // pred_fallthru
    _

</llo_original>
